<compile_context>
chip_gen: v5e
topology: v5e:2x2
jax: 0.10.0
libtpu: 0.0.40
codegen_flags: <defaults>
</compile_context>

<pallas_src>
import functools
import jax
import jax.numpy as jnp
from jax.experimental import pallas as pl
from jax.experimental.pallas import tpu as pltpu

# --- small, kernel-consistent config (scaled-down from the PyTorch Config) ---
BATCH = 2
SEQ = 8            # T (<= block_size)
N_EMBD = 32        # C
N_HEAD = 4
HEAD_SIZE = N_EMBD // N_HEAD
LN_EPS = 1e-5

# packed-vector slab row order (contract shared by prepare_params / kernel):
#   row 0: bf1 (width 4C) | 1: g1 | 2: be1 | 3: g2 | 4: be2 | 5: bproj | 6: bf2 | 7: pad


def _layer_norm(y, gamma, beta):
    mu = jnp.mean(y, axis=-1, keepdims=True)
    var = jnp.mean((y - mu) ** 2, axis=-1, keepdims=True)
    return (y - mu) * jax.lax.rsqrt(var + LN_EPS) * gamma + beta


def _block_kernel(x_ref, wqkv_ref, wproj_ref, w1_ref, w2_ref, vecs_ref, o_ref,
                  *, n_head, head_size):
    """One grid step == one batch element: full (T, C) activation in VMEM."""
    x = x_ref[0]                             # (T, C)
    T, C = x.shape
    H = n_head

    # packed small vectors: one (8, 4C) tile
    vecs = vecs_ref[...]
    bf1 = vecs[0:1, :]                       # (1, 4C)
    g1, be1 = vecs[1:2, :C], vecs[2:3, :C]
    g2, be2 = vecs[3:4, :C], vecs[4:5, :C]
    bproj, bf2 = vecs[5:6, :C], vecs[6:7, :C]

    # ---- LayerNorm 1 + per-head QKV projection (scale pre-folded into Wq) ----
    h1 = _layer_norm(x, g1, be1)                                   # (T, C)
    hb = jnp.broadcast_to(h1[None], (3 * H, T, C))                 # (3H, T, C)
    qkv = jnp.einsum('htc,hcd->htd', hb, wqkv_ref[...],
                     preferred_element_type=jnp.float32)           # (3H, T, hs)
    q_h = qkv[:H]                                                  # (H, T, hs)
    k_h = qkv[H:2 * H]
    v_h = qkv[2 * H:]

    # ---- scores + single (T, T) causal additive bias, broadcast over heads ----
    s = jnp.einsum('hqd,hkd->hqk', q_h, k_h,
                   preferred_element_type=jnp.float32)             # (H, T, T)
    row = jax.lax.broadcasted_iota(jnp.int32, (T, T), 0)
    col = jax.lax.broadcasted_iota(jnp.int32, (T, T), 1)
    bias = jnp.where(row >= col, 0.0, -1e30).astype(jnp.float32)   # (T, T)
    s = s + bias[None]

    s = s - jnp.max(s, axis=-1, keepdims=True)
    p = jnp.exp(s)
    p = p / jnp.sum(p, axis=-1, keepdims=True)

    # ---- PV, with the head concat folded into the output projection ----
    o_h = jnp.einsum('hqk,hkd->hqd', p, v_h,
                     preferred_element_type=jnp.float32)           # (H, T, hs)
    sa_h = jnp.einsum('hqd,hdc->hqc', o_h, wproj_ref[...],
                      preferred_element_type=jnp.float32)          # (H, T, C)
    sa = sa_h[0]
    for i in range(1, H):                    # tiny static unroll (H adds)
        sa = sa + sa_h[i]
    sa = sa + bproj
    x1 = x + sa                                                    # residual 1

    # ---- LayerNorm 2 + feed-forward: Linear(C,4C) -> ReLU -> Linear(4C,C) ----
    h2 = _layer_norm(x1, g2, be2)
    f = jnp.dot(h2, w1_ref[...], preferred_element_type=jnp.float32) + bf1
    f = jnp.maximum(f, 0.0)
    f = jnp.dot(f, w2_ref[...], preferred_element_type=jnp.float32) + bf2

    o_ref[0] = x1 + f                                              # residual 2


def prepare_params(p):
    """One-time repacking of the raw parameters into kernel-ready layout."""
    C, H, hs = N_EMBD, N_HEAD, HEAD_SIZE
    scale = float(C) ** (-0.5)               # matches the PyTorch code exactly

    def per_head_cols(w):                     # (C, C) -> (H, C, hs)
        return jnp.transpose(w.reshape(C, H, hs), (1, 0, 2))

    wqkv_h = jnp.concatenate([per_head_cols(p["wq"]) * scale,
                              per_head_cols(p["wk"]),
                              per_head_cols(p["wv"])], axis=0)      # (3H, C, hs)
    wproj_h = p["wproj"].reshape(H, hs, C)                          # (H, hs, C)

    def pad_row(v):                           # (1, C) -> (1, 4C)
        return jnp.pad(v, ((0, 0), (0, 3 * C)))

    vecs = jnp.concatenate([
        p["bf1"],
        pad_row(p["g1"]), pad_row(p["be1"]),
        pad_row(p["g2"]), pad_row(p["be2"]),
        pad_row(p["bproj"]), pad_row(p["bf2"]),
        jnp.zeros((1, 4 * C), jnp.float32),
    ], axis=0)                                                      # (8, 4C)

    return {"wqkv_h": wqkv_h, "wproj_h": wproj_h,
            "w1": p["w1"], "w2": p["w2"], "vecs": vecs}


def block_forward(x, kp):
    """x: (B, T, C); kp: output of prepare_params."""
    B, T, C = x.shape
    H, hs = N_HEAD, HEAD_SIZE

    kernel = functools.partial(_block_kernel, n_head=H, head_size=hs)

    def const_spec(shape):
        zeros = (0,) * len(shape)
        return pl.BlockSpec(shape, lambda b, _z=zeros: _z)

    return pl.pallas_call(
        kernel,
        out_shape=jax.ShapeDtypeStruct((B, T, C), jnp.float32),
        grid_spec=pltpu.PrefetchScalarGridSpec(
            num_scalar_prefetch=0,
            grid=(B,),                                   # one batch element / step
            in_specs=[
                pl.BlockSpec((1, T, C), lambda b: (b, 0, 0)),   # activations
                const_spec((3 * H, C, hs)),                     # packed Wqkv (resident)
                const_spec((H, hs, C)),                         # packed Wproj (resident)
                const_spec((C, 4 * C)),                         # ffn W1
                const_spec((4 * C, C)),                         # ffn W2
                const_spec((8, 4 * C)),                         # packed bias/gamma slab
            ],
            out_specs=pl.BlockSpec((1, T, C), lambda b: (b, 0, 0)),
        ),
        compiler_params=pltpu.CompilerParams(
            dimension_semantics=("parallel",)),          # megacore-shardable on v7x
    )(x, kp["wqkv_h"], kp["wproj_h"], kp["w1"], kp["w2"], kp["vecs"])


def init_params(key):
    """Deterministic synthetic parameters (shapes follow the PyTorch module)."""
    ks = jax.random.split(key, 8)
    C = N_EMBD
    sc = 0.02
    return {
        # q/k/v: columns grouped per head (head h uses cols [h*hs, (h+1)*hs))
        "wq": sc * jax.random.normal(ks[0], (C, C), jnp.float32),
        "wk": sc * jax.random.normal(ks[1], (C, C), jnp.float32),
        "wv": sc * jax.random.normal(ks[2], (C, C), jnp.float32),
        "wproj": sc * jax.random.normal(ks[3], (C, C), jnp.float32),
        "bproj": sc * jax.random.normal(ks[4], (1, C), jnp.float32),
        "g1": jnp.ones((1, C), jnp.float32),
        "be1": jnp.zeros((1, C), jnp.float32),
        "g2": jnp.ones((1, C), jnp.float32),
        "be2": jnp.zeros((1, C), jnp.float32),
        "w1": sc * jax.random.normal(ks[5], (C, 4 * C), jnp.float32),
        "bf1": sc * jax.random.normal(ks[6], (1, 4 * C), jnp.float32),
        "w2": sc * jax.random.normal(ks[7], (4 * C, C), jnp.float32),
        "bf2": jnp.zeros((1, C), jnp.float32),
    }


def block_forward_ref(x, p):
    """Pure-JAX reference mirroring the PyTorch forward (dropout = identity)."""
    B, T, C = x.shape

    def ln(y, g, b):
        mu = jnp.mean(y, axis=-1, keepdims=True)
        var = jnp.mean((y - mu) ** 2, axis=-1, keepdims=True)
        return (y - mu) / jnp.sqrt(var + LN_EPS) * g + b

    h = ln(x, p["g1"], p["be1"])
    q = h @ p["wq"]; k = h @ p["wk"]; v = h @ p["wv"]
    mask = jnp.tril(jnp.ones((T, T), bool))
    outs = []
    for hh in range(N_HEAD):
        sl = slice(hh * HEAD_SIZE, (hh + 1) * HEAD_SIZE)
        wei = (q[:, :, sl] @ jnp.swapaxes(k[:, :, sl], -2, -1)) * (C ** -0.5)
        wei = jnp.where(mask, wei, -jnp.inf)
        wei = jax.nn.softmax(wei, axis=-1)
        outs.append(wei @ v[:, :, sl])
    sa = jnp.concatenate(outs, axis=-1) @ p["wproj"] + p["bproj"]
    x1 = x + sa
    h2 = ln(x1, p["g2"], p["be2"])
    f = jnp.maximum(h2 @ p["w1"] + p["bf1"], 0.0) @ p["w2"] + p["bf2"]
    return x1 + f


if __name__ == "__main__":
    key = jax.random.PRNGKey(0)
    kx, kp = jax.random.split(key)
    x = jax.random.normal(kx, (BATCH, SEQ, N_EMBD), jnp.float32)
    params = init_params(kp)

    kernel_params = prepare_params(params)        # one-time prep, off the call path
    out = jax.block_until_ready(block_forward(x, kernel_params))

    ref = block_forward_ref(x, params)
    assert out.shape == (BATCH, SEQ, N_EMBD)
    assert jnp.allclose(out, ref, atol=1e-4, rtol=1e-4), "mismatch vs reference"
    print("KERNEL_OK")
</pallas_src>

<mosaic_0001>
module attributes {stable_mosaic.version = 11 : i64} {
  func.func @_block_kernel(%arg0: i32, %arg1: memref<1x8x32xf32, #tpu.memory_space<vmem>>, %arg2: memref<12x32x8xf32, #tpu.memory_space<vmem>>, %arg3: memref<4x8x32xf32, #tpu.memory_space<vmem>>, %arg4: memref<32x128xf32, #tpu.memory_space<vmem>>, %arg5: memref<128x32xf32, #tpu.memory_space<vmem>>, %arg6: memref<8x128xf32, #tpu.memory_space<vmem>>, %arg7: memref<1x8x32xf32, #tpu.memory_space<vmem>>) attributes {dimension_semantics = [#tpu.dimension_semantics<parallel>], iteration_bounds = array<i64: 2>, scalar_prefetch = 0 : i64, scratch_operands = 0 : i64, tpu.core_type = #tpu.core_type<tc>, window_params = [{transform_indices = @transform_0, window_bounds = array<i64: 1, 8, 32>}, {pipeline_mode = #tpu.pipeline_mode<synchronous>, transform_indices = @transform_1, window_bounds = array<i64: 12, 32, 8>}, {pipeline_mode = #tpu.pipeline_mode<synchronous>, transform_indices = @transform_2, window_bounds = array<i64: 4, 8, 32>}, {pipeline_mode = #tpu.pipeline_mode<synchronous>, transform_indices = @transform_3, window_bounds = array<i64: 32, 128>}, {pipeline_mode = #tpu.pipeline_mode<synchronous>, transform_indices = @transform_4, window_bounds = array<i64: 128, 32>}, {pipeline_mode = #tpu.pipeline_mode<synchronous>, transform_indices = @transform_5, window_bounds = array<i64: 8, 128>}, {transform_indices = @transform_6, window_bounds = array<i64: 1, 8, 32>}]} {
    %c0 = arith.constant 0 : index
    %c0_0 = arith.constant 0 : index
    %c0_1 = arith.constant 0 : index
    %0 = vector.load %arg1[%c0, %c0_0, %c0_1] : memref<1x8x32xf32, #tpu.memory_space<vmem>>, vector<1x8x32xf32>
    %1 = vector.shape_cast %0 : vector<1x8x32xf32> to vector<8x32xf32>
    %c0_2 = arith.constant 0 : index
    %c0_3 = arith.constant 0 : index
    %2 = vector.load %arg6[%c0_2, %c0_3] : memref<8x128xf32, #tpu.memory_space<vmem>>, vector<8x128xf32>
    %3 = vector.extract_strided_slice %2 {offsets = [0, 0], sizes = [1, 128], strides = [1, 1]} : vector<8x128xf32> to vector<1x128xf32>
    %4 = vector.extract_strided_slice %2 {offsets = [1, 0], sizes = [1, 32], strides = [1, 1]} : vector<8x128xf32> to vector<1x32xf32>
    %5 = vector.extract_strided_slice %2 {offsets = [2, 0], sizes = [1, 32], strides = [1, 1]} : vector<8x128xf32> to vector<1x32xf32>
    %6 = vector.extract_strided_slice %2 {offsets = [3, 0], sizes = [1, 32], strides = [1, 1]} : vector<8x128xf32> to vector<1x32xf32>
    %7 = vector.extract_strided_slice %2 {offsets = [4, 0], sizes = [1, 32], strides = [1, 1]} : vector<8x128xf32> to vector<1x32xf32>
    %8 = vector.extract_strided_slice %2 {offsets = [5, 0], sizes = [1, 32], strides = [1, 1]} : vector<8x128xf32> to vector<1x32xf32>
    %9 = vector.extract_strided_slice %2 {offsets = [6, 0], sizes = [1, 32], strides = [1, 1]} : vector<8x128xf32> to vector<1x32xf32>
    %cst = arith.constant dense<0.000000e+00> : vector<8xf32>
    %10 = vector.multi_reduction <add>, %1, %cst [1] : vector<8x32xf32> to vector<8xf32>
    %11 = vector.shape_cast %10 : vector<8xf32> to vector<8x1xf32>
    %cst_4 = arith.constant 3.200000e+01 : f32
    %12 = vector.broadcast %cst_4 : f32 to vector<8x1xf32>
    %13 = arith.divf %11, %12 : vector<8x1xf32>
    %14 = vector.broadcast %13 : vector<8x1xf32> to vector<8x32xf32>
    %15 = arith.subf %1, %14 : vector<8x32xf32>
    %16 = arith.mulf %15, %15 : vector<8x32xf32>
    %cst_5 = arith.constant dense<0.000000e+00> : vector<8xf32>
    %17 = vector.multi_reduction <add>, %16, %cst_5 [1] : vector<8x32xf32> to vector<8xf32>
    %18 = vector.shape_cast %17 : vector<8xf32> to vector<8x1xf32>
    %cst_6 = arith.constant 3.200000e+01 : f32
    %19 = vector.broadcast %cst_6 : f32 to vector<8x1xf32>
    %20 = arith.divf %18, %19 : vector<8x1xf32>
    %21 = vector.broadcast %13 : vector<8x1xf32> to vector<8x32xf32>
    %22 = arith.subf %1, %21 : vector<8x32xf32>
    %cst_7 = arith.constant 9.99999974E-6 : f32
    %23 = vector.broadcast %cst_7 : f32 to vector<8x1xf32>
    %24 = arith.addf %20, %23 : vector<8x1xf32>
    %25 = math.rsqrt %24 : vector<8x1xf32>
    %26 = vector.broadcast %25 : vector<8x1xf32> to vector<8x32xf32>
    %27 = arith.mulf %22, %26 : vector<8x32xf32>
    %28 = vector.broadcast %4 : vector<1x32xf32> to vector<8x32xf32>
    %29 = arith.mulf %27, %28 : vector<8x32xf32>
    %30 = vector.broadcast %5 : vector<1x32xf32> to vector<8x32xf32>
    %31 = arith.addf %29, %30 : vector<8x32xf32>
    %32 = vector.shape_cast %31 : vector<8x32xf32> to vector<1x8x32xf32>
    %33 = vector.shape_cast %32 : vector<1x8x32xf32> to vector<1x8x32xf32>
    %34 = vector.broadcast %33 : vector<1x8x32xf32> to vector<12x8x32xf32>
    %c0_8 = arith.constant 0 : index
    %c0_9 = arith.constant 0 : index
    %c0_10 = arith.constant 0 : index
    %35 = vector.load %arg2[%c0_8, %c0_9, %c0_10] : memref<12x32x8xf32, #tpu.memory_space<vmem>>, vector<12x32x8xf32>
    "tpu.trace_start"() <{level = 10 : i32, message = "htc,hcd->htd"}> : () -> ()
    %cst_11 = arith.constant dense<0.000000e+00> : vector<12x8x8xf32>
    %36 = tpu.matmul %34, %35, %cst_11 {dimension_numbers = #tpu.dot_dimension_numbers<[2], [1], [1], [2], [0, 0, 0, 1, 1, 2], [0], [0]>} : vector<12x8x32xf32>, vector<12x32x8xf32>, vector<12x8x8xf32> -> vector<12x8x8xf32>
    "tpu.trace_stop"() : () -> ()
    %37 = vector.extract_strided_slice %36 {offsets = [0, 0, 0], sizes = [4, 8, 8], strides = [1, 1, 1]} : vector<12x8x8xf32> to vector<4x8x8xf32>
    %38 = vector.extract_strided_slice %36 {offsets = [4, 0, 0], sizes = [4, 8, 8], strides = [1, 1, 1]} : vector<12x8x8xf32> to vector<4x8x8xf32>
    %39 = vector.extract_strided_slice %36 {offsets = [8, 0, 0], sizes = [4, 8, 8], strides = [1, 1, 1]} : vector<12x8x8xf32> to vector<4x8x8xf32>
    "tpu.trace_start"() <{level = 10 : i32, message = "hqd,hkd->hqk"}> : () -> ()
    %cst_12 = arith.constant dense<0.000000e+00> : vector<4x8x8xf32>
    %40 = tpu.matmul %37, %38, %cst_12 {dimension_numbers = #tpu.dot_dimension_numbers<[2], [2], [1], [1], [0, 0, 0, 1, 1, 1], [0], [0]>} : vector<4x8x8xf32>, vector<4x8x8xf32>, vector<4x8x8xf32> -> vector<4x8x8xf32>
    "tpu.trace_stop"() : () -> ()
    %41 = tpu.iota {dimensions = array<i32: 0>} : vector<8x8xi32>
    %42 = tpu.iota {dimensions = array<i32: 1>} : vector<8x8xi32>
    %43 = arith.cmpi sge, %41, %42 : vector<8x8xi32>
    %cst_13 = arith.constant 0.000000e+00 : f32
    %cst_14 = arith.constant -1.000000e+30 : f32
    %44 = vector.broadcast %cst_13 : f32 to vector<8x8xf32>
    %45 = vector.broadcast %cst_14 : f32 to vector<8x8xf32>
    %46 = arith.select %43, %44, %45 : vector<8x8xi1>, vector<8x8xf32>
    %47 = vector.shape_cast %46 : vector<8x8xf32> to vector<1x8x8xf32>
    %48 = vector.broadcast %47 : vector<1x8x8xf32> to vector<4x8x8xf32>
    %49 = arith.addf %40, %48 : vector<4x8x8xf32>
    %cst_15 = arith.constant dense<0xFF800000> : vector<4x8xf32>
    %50 = vector.multi_reduction <maximumf>, %49, %cst_15 [2] : vector<4x8x8xf32> to vector<4x8xf32>
    %51 = vector.shape_cast %50 : vector<4x8xf32> to vector<4x8x1xf32>
    %52 = vector.broadcast %51 : vector<4x8x1xf32> to vector<4x8x8xf32>
    %53 = arith.subf %49, %52 : vector<4x8x8xf32>
    %54 = math.exp %53 : vector<4x8x8xf32>
    %cst_16 = arith.constant dense<0.000000e+00> : vector<4x8xf32>
    %55 = vector.multi_reduction <add>, %54, %cst_16 [2] : vector<4x8x8xf32> to vector<4x8xf32>
    %56 = vector.shape_cast %55 : vector<4x8xf32> to vector<4x8x1xf32>
    %57 = vector.broadcast %56 : vector<4x8x1xf32> to vector<4x8x8xf32>
    %58 = arith.divf %54, %57 : vector<4x8x8xf32>
    "tpu.trace_start"() <{level = 10 : i32, message = "hqk,hkd->hqd"}> : () -> ()
    %cst_17 = arith.constant dense<0.000000e+00> : vector<4x8x8xf32>
    %59 = tpu.matmul %58, %39, %cst_17 {dimension_numbers = #tpu.dot_dimension_numbers<[2], [1], [1], [2], [0, 0, 0, 1, 1, 2], [0], [0]>} : vector<4x8x8xf32>, vector<4x8x8xf32>, vector<4x8x8xf32> -> vector<4x8x8xf32>
    "tpu.trace_stop"() : () -> ()
    %c0_18 = arith.constant 0 : index
    %c0_19 = arith.constant 0 : index
    %c0_20 = arith.constant 0 : index
    %60 = vector.load %arg3[%c0_18, %c0_19, %c0_20] : memref<4x8x32xf32, #tpu.memory_space<vmem>>, vector<4x8x32xf32>
    "tpu.trace_start"() <{level = 10 : i32, message = "hqd,hdc->hqc"}> : () -> ()
    %cst_21 = arith.constant dense<0.000000e+00> : vector<4x8x32xf32>
    %61 = tpu.matmul %59, %60, %cst_21 {dimension_numbers = #tpu.dot_dimension_numbers<[2], [1], [1], [2], [0, 0, 0, 1, 1, 2], [0], [0]>} : vector<4x8x8xf32>, vector<4x8x32xf32>, vector<4x8x32xf32> -> vector<4x8x32xf32>
    "tpu.trace_stop"() : () -> ()
    %62 = vector.extract_strided_slice %61 {offsets = [0, 0, 0], sizes = [1, 8, 32], strides = [1, 1, 1]} : vector<4x8x32xf32> to vector<1x8x32xf32>
    %63 = vector.shape_cast %62 : vector<1x8x32xf32> to vector<8x32xf32>
    %64 = vector.extract_strided_slice %61 {offsets = [1, 0, 0], sizes = [1, 8, 32], strides = [1, 1, 1]} : vector<4x8x32xf32> to vector<1x8x32xf32>
    %65 = vector.shape_cast %64 : vector<1x8x32xf32> to vector<8x32xf32>
    %66 = arith.addf %63, %65 : vector<8x32xf32>
    %67 = vector.extract_strided_slice %61 {offsets = [2, 0, 0], sizes = [1, 8, 32], strides = [1, 1, 1]} : vector<4x8x32xf32> to vector<1x8x32xf32>
    %68 = vector.shape_cast %67 : vector<1x8x32xf32> to vector<8x32xf32>
    %69 = arith.addf %66, %68 : vector<8x32xf32>
    %70 = vector.extract_strided_slice %61 {offsets = [3, 0, 0], sizes = [1, 8, 32], strides = [1, 1, 1]} : vector<4x8x32xf32> to vector<1x8x32xf32>
    %71 = vector.shape_cast %70 : vector<1x8x32xf32> to vector<8x32xf32>
    %72 = arith.addf %69, %71 : vector<8x32xf32>
    %73 = vector.broadcast %8 : vector<1x32xf32> to vector<8x32xf32>
    %74 = arith.addf %72, %73 : vector<8x32xf32>
    %75 = arith.addf %1, %74 : vector<8x32xf32>
    %cst_22 = arith.constant dense<0.000000e+00> : vector<8xf32>
    %76 = vector.multi_reduction <add>, %75, %cst_22 [1] : vector<8x32xf32> to vector<8xf32>
    %77 = vector.shape_cast %76 : vector<8xf32> to vector<8x1xf32>
    %cst_23 = arith.constant 3.200000e+01 : f32
    %78 = vector.broadcast %cst_23 : f32 to vector<8x1xf32>
    %79 = arith.divf %77, %78 : vector<8x1xf32>
    %80 = vector.broadcast %79 : vector<8x1xf32> to vector<8x32xf32>
    %81 = arith.subf %75, %80 : vector<8x32xf32>
    %82 = arith.mulf %81, %81 : vector<8x32xf32>
    %cst_24 = arith.constant dense<0.000000e+00> : vector<8xf32>
    %83 = vector.multi_reduction <add>, %82, %cst_24 [1] : vector<8x32xf32> to vector<8xf32>
    %84 = vector.shape_cast %83 : vector<8xf32> to vector<8x1xf32>
    %cst_25 = arith.constant 3.200000e+01 : f32
    %85 = vector.broadcast %cst_25 : f32 to vector<8x1xf32>
    %86 = arith.divf %84, %85 : vector<8x1xf32>
    %87 = vector.broadcast %79 : vector<8x1xf32> to vector<8x32xf32>
    %88 = arith.subf %75, %87 : vector<8x32xf32>
    %cst_26 = arith.constant 9.99999974E-6 : f32
    %89 = vector.broadcast %cst_26 : f32 to vector<8x1xf32>
    %90 = arith.addf %86, %89 : vector<8x1xf32>
    %91 = math.rsqrt %90 : vector<8x1xf32>
    %92 = vector.broadcast %91 : vector<8x1xf32> to vector<8x32xf32>
    %93 = arith.mulf %88, %92 : vector<8x32xf32>
    %94 = vector.broadcast %6 : vector<1x32xf32> to vector<8x32xf32>
    %95 = arith.mulf %93, %94 : vector<8x32xf32>
    %96 = vector.broadcast %7 : vector<1x32xf32> to vector<8x32xf32>
    %97 = arith.addf %95, %96 : vector<8x32xf32>
    %c0_27 = arith.constant 0 : index
    %c0_28 = arith.constant 0 : index
    %98 = vector.load %arg4[%c0_27, %c0_28] : memref<32x128xf32, #tpu.memory_space<vmem>>, vector<32x128xf32>
    %cst_29 = arith.constant dense<0.000000e+00> : vector<8x128xf32>
    %99 = tpu.matmul %97, %98, %cst_29 {dimension_numbers = #tpu.dot_dimension_numbers<[1], [0], [0], [1], [0, 0, 1, 1], [], []>} : vector<8x32xf32>, vector<32x128xf32>, vector<8x128xf32> -> vector<8x128xf32>
    %100 = vector.broadcast %3 : vector<1x128xf32> to vector<8x128xf32>
    %101 = arith.addf %99, %100 : vector<8x128xf32>
    %cst_30 = arith.constant 0.000000e+00 : f32
    %102 = vector.broadcast %cst_30 : f32 to vector<8x128xf32>
    %103 = arith.maximumf %101, %102 : vector<8x128xf32>
    %c0_31 = arith.constant 0 : index
    %c0_32 = arith.constant 0 : index
    %104 = vector.load %arg5[%c0_31, %c0_32] : memref<128x32xf32, #tpu.memory_space<vmem>>, vector<128x32xf32>
    %cst_33 = arith.constant dense<0.000000e+00> : vector<8x32xf32>
    %105 = tpu.matmul %103, %104, %cst_33 {dimension_numbers = #tpu.dot_dimension_numbers<[1], [0], [0], [1], [0, 0, 1, 1], [], []>} : vector<8x128xf32>, vector<128x32xf32>, vector<8x32xf32> -> vector<8x32xf32>
    %106 = vector.broadcast %9 : vector<1x32xf32> to vector<8x32xf32>
    %107 = arith.addf %105, %106 : vector<8x32xf32>
    %108 = arith.addf %75, %107 : vector<8x32xf32>
    %c0_34 = arith.constant 0 : index
    %c0_35 = arith.constant 0 : index
    %c0_36 = arith.constant 0 : index
    %109 = vector.load %arg7[%c0_34, %c0_35, %c0_36] : memref<1x8x32xf32, #tpu.memory_space<vmem>>, vector<1x8x32xf32>
    %110 = vector.shape_cast %109 : vector<1x8x32xf32> to vector<8x32xf32>
    %111 = vector.shape_cast %108 : vector<8x32xf32> to vector<1x8x32xf32>
    tpu.vector_store %arg7[%c0_34, %c0_35, %c0_36], %111 {strides = array<i32>} : memref<1x8x32xf32, #tpu.memory_space<vmem>>, vector<1x8x32xf32>,
    return
  }
  func.func @transform_0(%arg0: i32) -> (i32, i32, i32) {
    %c0_i32 = arith.constant 0 : i32
    %c0_i32_0 = arith.constant 0 : i32
    %c0_i32_1 = arith.constant 0 : i32
    return %arg0, %c0_i32, %c0_i32_0 : i32, i32, i32
  }
  func.func @transform_1(%arg0: i32) -> (i32, i32, i32) {
    %c0_i32 = arith.constant 0 : i32
    %c0_i32_0 = arith.constant 0 : i32
    %c0_i32_1 = arith.constant 0 : i32
    %c0_i32_2 = arith.constant 0 : i32
    return %c0_i32, %c0_i32_0, %c0_i32_1 : i32, i32, i32
  }
  func.func @transform_2(%arg0: i32) -> (i32, i32, i32) {
    %c0_i32 = arith.constant 0 : i32
    %c0_i32_0 = arith.constant 0 : i32
    %c0_i32_1 = arith.constant 0 : i32
    %c0_i32_2 = arith.constant 0 : i32
    return %c0_i32, %c0_i32_0, %c0_i32_1 : i32, i32, i32
  }
  func.func @transform_3(%arg0: i32) -> (i32, i32) {
    %c0_i32 = arith.constant 0 : i32
    %c0_i32_0 = arith.constant 0 : i32
    %c0_i32_1 = arith.constant 0 : i32
    return %c0_i32, %c0_i32_0 : i32, i32
  }
  func.func @transform_4(%arg0: i32) -> (i32, i32) {
    %c0_i32 = arith.constant 0 : i32
    %c0_i32_0 = arith.constant 0 : i32
    %c0_i32_1 = arith.constant 0 : i32
    return %c0_i32, %c0_i32_0 : i32, i32
  }
  func.func @transform_5(%arg0: i32) -> (i32, i32) {
    %c0_i32 = arith.constant 0 : i32
    %c0_i32_0 = arith.constant 0 : i32
    %c0_i32_1 = arith.constant 0 : i32
    return %c0_i32, %c0_i32_0 : i32, i32
  }
  func.func @transform_6(%arg0: i32) -> (i32, i32, i32) {
    %c0_i32 = arith.constant 0 : i32
    %c0_i32_0 = arith.constant 0 : i32
    %c0_i32_1 = arith.constant 0 : i32
    return %arg0, %c0_i32, %c0_i32_0 : i32, i32, i32
  }
}

</mosaic_0001>

<llo_original>
// kernel: tpu_custom_call.1
$region0: #{tpu_custom_call.1}
  #allocation0 [shape = 'u32[]', space=smem, size = 0x4, offset = 0x4, fixed_abs, tag = 'smem constant byte address 0x4 - core index']
  #allocation1 [shape = 'u32[72,128]{1,0:T(1,128)}', space=vmem, size = 0x9000, scoped, tag = 'internal scratch']
  %s0 = inlined_call_operand.vmem [shape: f32[2,8,32], index: 0, kind: input, shape index: {}]
  %s1 = inlined_call_operand.vmem [shape: f32[12,32,8], index: 1, kind: input, shape index: {}]
  %s2 = inlined_call_operand.vmem [shape: f32[4,8,32], index: 2, kind: input, shape index: {}]
  %s3 = inlined_call_operand.vmem [shape: f32[32,128], index: 3, kind: input, shape index: {}]
  %s4 = inlined_call_operand.vmem [shape: f32[128,32], index: 4, kind: input, shape index: {}]
  %s5 = inlined_call_operand.vmem [shape: f32[8,128], index: 5, kind: input, shape index: {}]
  %s6 = inlined_call_operand.hbm [shape: f32[2,8,32], index: 6, kind: output, shape index: {}]
  %s7 = sld [smem:[#allocation0]]
  $region57: #{tpu_custom_call.1} parent=0
    _
  %s9 = ssub.s32 1, %s7
  %s10 = scalar_select 0, %s9, %s7
  $region1: #{tpu_custom_call.1} parent=0
    #allocation2 [shape = 'u8[8192]{0}', space=vmem, size = 0x2000, scoped, tag = 'output window, operand 0']
    #allocation3 [shape = 's32[2]{0}', space=sflag, size = 0x8, scoped, tag = 'scoped memory for tpu_custom_call.1']
    %11 = vsyncpa [#allocation3], 0
    %s12 = scalar_lea.sflag [#allocation3], 1
    %13 = vsyncpa %s12, 0
    loop: start=0, step=1, limit=4
    $region2: #{tpu_custom_call.1} parent=1 // loop_pre_header
      _
    $region3: #{tpu_custom_call.1} parent=1 // loop_header
      %s15 = sphi 0, %s19
      %p16 = scmp.ge.s32.totalorder %s15, 4
      %s25 = sphi 0, %s27
      %s28 = sphi 0, %s25
      %s29 = sphi 0, %s28
      %s45 = sphi 0, %s29
      %s49 = sphi 0, %s49
      %s51 = sphi 0, %s49
      %s52 = sphi 0, %s51
      %s66 = sphi 0, %s52
      %s70 = sphi 0, %s70
      %s72 = sphi 0, %s70
      %s73 = sphi 0, %s72
      %s87 = sphi 0, %s73
      %s91 = sphi 0, %s91
      %s93 = sphi 0, %s91
      %s94 = sphi 0, %s93
      %s108 = sphi 0, %s94
      %s112 = sphi 0, %s112
      %s114 = sphi 0, %s112
      %s115 = sphi 0, %s114
      %s129 = sphi 0, %s115
      %s133 = sphi 0, %s133
      %s135 = sphi 0, %s133
      %s136 = sphi 0, %s135
      %s150 = sphi 0, %s136
      %s156 = sphi 0, %s158
      %s159 = sphi 0, %s156
      %s160 = sphi 0, %s159
      %s176 = sphi 0, %s160
    $region4: #{tpu_custom_call.1} parent=1 // loop_header_branch
      %18 = sbr.rel (%p16) target = $region8
    $region5: #{tpu_custom_call.1} parent=1 // loop_body
      %s20 = ssub.s32 %s15, 1
      %s21 = ssub.s32 %s15, 2
      %s22 = sadd.s32 %s15, 1
      %s23 = ssub.s32 %s15, %s22
      %p24 = scmp.eq.s32.totalorder %s23, 0
      %s26 = sadd.s32 %s25, 1
      %s27 = scalar_select %p24, %s25, %s26
      %p30 = pneg %p24
      %p31 = scmp.eq.s32.totalorder %s15, 1
      %p32 = por %p30, %p31
      %p33 = scmp.ne.s32.totalorder %s25, %s28
      %p34 = scmp.eq.s32.totalorder %s15, 0
      %p35 = por %p33, %p34
      %p36 = scmp.ne.s32.totalorder %s25, %s28
      %p37 = scmp.eq.s32.totalorder %s20, 1
      %p38 = por %p36, %p37
      %p39 = scmp.ne.s32.totalorder %s28, %s29
      %p40 = scmp.eq.s32.totalorder %s20, 0
      %p41 = por %p39, %p40
      %p42 = scmp.ne.s32.totalorder %s28, %s29
      %p43 = scmp.eq.s32.totalorder %s21, 1
      %p44 = por %p42, %p43
      %p46 = scmp.ne.s32.totalorder %s29, %s45
      %p47 = scmp.eq.s32.totalorder %s21, 0
      %p48 = por %p46, %p47
      %s50 = sadd.s32 %s49, 1
      %p53 = scmp.eq.s32.totalorder %s15, 1
      %p54 = scmp.ne.s32.totalorder %s49, %s51
      %p55 = scmp.eq.s32.totalorder %s15, 0
      %p56 = por %p54, %p55
      %p57 = scmp.ne.s32.totalorder %s49, %s51
      %p58 = scmp.eq.s32.totalorder %s20, 1
      %p59 = por %p57, %p58
      %p60 = scmp.ne.s32.totalorder %s51, %s52
      %p61 = scmp.eq.s32.totalorder %s20, 0
      %p62 = por %p60, %p61
      %p63 = scmp.ne.s32.totalorder %s51, %s52
      %p64 = scmp.eq.s32.totalorder %s21, 1
      %p65 = por %p63, %p64
      %p67 = scmp.ne.s32.totalorder %s52, %s66
      %p68 = scmp.eq.s32.totalorder %s21, 0
      %p69 = por %p67, %p68
      %s71 = sadd.s32 %s70, 1
      %p74 = scmp.eq.s32.totalorder %s15, 1
      %p75 = scmp.ne.s32.totalorder %s70, %s72
      %p76 = scmp.eq.s32.totalorder %s15, 0
      %p77 = por %p75, %p76
      %p78 = scmp.ne.s32.totalorder %s70, %s72
      %p79 = scmp.eq.s32.totalorder %s20, 1
      %p80 = por %p78, %p79
      %p81 = scmp.ne.s32.totalorder %s72, %s73
      %p82 = scmp.eq.s32.totalorder %s20, 0
      %p83 = por %p81, %p82
      %p84 = scmp.ne.s32.totalorder %s72, %s73
      %p85 = scmp.eq.s32.totalorder %s21, 1
      %p86 = por %p84, %p85
      %p88 = scmp.ne.s32.totalorder %s73, %s87
      %p89 = scmp.eq.s32.totalorder %s21, 0
      %p90 = por %p88, %p89
      %s92 = sadd.s32 %s91, 1
      %p95 = scmp.eq.s32.totalorder %s15, 1
      %p96 = scmp.ne.s32.totalorder %s91, %s93
      %p97 = scmp.eq.s32.totalorder %s15, 0
      %p98 = por %p96, %p97
      %p99 = scmp.ne.s32.totalorder %s91, %s93
      %p100 = scmp.eq.s32.totalorder %s20, 1
      %p101 = por %p99, %p100
      %p102 = scmp.ne.s32.totalorder %s93, %s94
      %p103 = scmp.eq.s32.totalorder %s20, 0
      %p104 = por %p102, %p103
      %p105 = scmp.ne.s32.totalorder %s93, %s94
      %p106 = scmp.eq.s32.totalorder %s21, 1
      %p107 = por %p105, %p106
      %p109 = scmp.ne.s32.totalorder %s94, %s108
      %p110 = scmp.eq.s32.totalorder %s21, 0
      %p111 = por %p109, %p110
      %s113 = sadd.s32 %s112, 1
      %p116 = scmp.eq.s32.totalorder %s15, 1
      %p117 = scmp.ne.s32.totalorder %s112, %s114
      %p118 = scmp.eq.s32.totalorder %s15, 0
      %p119 = por %p117, %p118
      %p120 = scmp.ne.s32.totalorder %s112, %s114
      %p121 = scmp.eq.s32.totalorder %s20, 1
      %p122 = por %p120, %p121
      %p123 = scmp.ne.s32.totalorder %s114, %s115
      %p124 = scmp.eq.s32.totalorder %s20, 0
      %p125 = por %p123, %p124
      %p126 = scmp.ne.s32.totalorder %s114, %s115
      %p127 = scmp.eq.s32.totalorder %s21, 1
      %p128 = por %p126, %p127
      %p130 = scmp.ne.s32.totalorder %s115, %s129
      %p131 = scmp.eq.s32.totalorder %s21, 0
      %p132 = por %p130, %p131
      %s134 = sadd.s32 %s133, 1
      %p137 = scmp.eq.s32.totalorder %s15, 1
      %p138 = scmp.ne.s32.totalorder %s133, %s135
      %p139 = scmp.eq.s32.totalorder %s15, 0
      %p140 = por %p138, %p139
      %p141 = scmp.ne.s32.totalorder %s133, %s135
      %p142 = scmp.eq.s32.totalorder %s20, 1
      %p143 = por %p141, %p142
      %p144 = scmp.ne.s32.totalorder %s135, %s136
      %p145 = scmp.eq.s32.totalorder %s20, 0
      %p146 = por %p144, %p145
      %p147 = scmp.ne.s32.totalorder %s135, %s136
      %p148 = scmp.eq.s32.totalorder %s21, 1
      %p149 = por %p147, %p148
      %p151 = scmp.ne.s32.totalorder %s136, %s150
      %p152 = scmp.eq.s32.totalorder %s21, 0
      %p153 = por %p151, %p152
      %s154 = ssub.s32 %s15, %s22
      %p155 = scmp.eq.s32.totalorder %s154, 0
      %s157 = sadd.s32 %s156, 1
      %s158 = scalar_select %p155, %s156, %s157
      %p161 = pneg %p155
      %p162 = scmp.eq.s32.totalorder %s15, 1
      %p163 = por %p161, %p162
      %p164 = scmp.ne.s32.totalorder %s156, %s159
      %p165 = scmp.eq.s32.totalorder %s15, 0
      %p166 = por %p164, %p165
      %p167 = scmp.ne.s32.totalorder %s156, %s159
      %p168 = scmp.eq.s32.totalorder %s20, 1
      %p169 = por %p167, %p168
      %p170 = scmp.ne.s32.totalorder %s159, %s160
      %p171 = scmp.eq.s32.totalorder %s20, 0
      %p172 = por %p170, %p171
      %p173 = scmp.ne.s32.totalorder %s159, %s160
      %p174 = scmp.eq.s32.totalorder %s21, 1
      %p175 = por %p173, %p174
      %p177 = scmp.ne.s32.totalorder %s160, %s176
      %p178 = scmp.eq.s32.totalorder %s21, 0
      %p179 = por %p177, %p178
      %p180 = scmp.le.s32.totalorder 1, %s15
      %p181 = scmp.lt.s32.totalorder %s15, 3
      %p182 = pnand %p180, %p181
      %p183 = pneg %p182
      // Predicated region
      $region9: #{tpu_custom_call.1} parent=5 // pred_check
        _
      $region10: #{tpu_custom_call.1} parent=5 // pred_check_branch
        %185 = sbr.rel (%p182) target = $region12
      $region11: #{tpu_custom_call.1} parent=5 // pred_region
        %s186 = ssub.s32 %s15, 1
        // Predicated region
        $region13: #{tpu_custom_call.1} parent=11 // pred_check
          %p187 = pneg %p62
        $region14: #{tpu_custom_call.1} parent=11 // pred_check_branch
          %189 = sbr.rel (%p187) target = $region16
        $region15: #{tpu_custom_call.1} parent=11 // pred_region
          _
        $region16: #{tpu_custom_call.1} parent=11 // pred_fallthru
          _
        // Predicated region
        $region17: #{tpu_custom_call.1} parent=11 // pred_check
          %p190 = pneg %p83
        $region18: #{tpu_custom_call.1} parent=11 // pred_check_branch
          %192 = sbr.rel (%p190) target = $region20
        $region19: #{tpu_custom_call.1} parent=11 // pred_region
          _
        $region20: #{tpu_custom_call.1} parent=11 // pred_fallthru
          _
        // Predicated region
        $region21: #{tpu_custom_call.1} parent=11 // pred_check
          %p193 = pneg %p104
        $region22: #{tpu_custom_call.1} parent=11 // pred_check_branch
          %195 = sbr.rel (%p193) target = $region24
        $region23: #{tpu_custom_call.1} parent=11 // pred_region
          _
        $region24: #{tpu_custom_call.1} parent=11 // pred_fallthru
          _
        // Predicated region
        $region25: #{tpu_custom_call.1} parent=11 // pred_check
          %p196 = pneg %p125
        $region26: #{tpu_custom_call.1} parent=11 // pred_check_branch
          %198 = sbr.rel (%p196) target = $region28
        $region27: #{tpu_custom_call.1} parent=11 // pred_region
          _
        $region28: #{tpu_custom_call.1} parent=11 // pred_fallthru
          _
        // Predicated region
        $region29: #{tpu_custom_call.1} parent=11 // pred_check
          %p199 = pneg %p146
        $region30: #{tpu_custom_call.1} parent=11 // pred_check_branch
          %201 = sbr.rel (%p199) target = $region32
        $region31: #{tpu_custom_call.1} parent=11 // pred_region
          _
        $region32: #{tpu_custom_call.1} parent=11 // pred_fallthru
          _
      $region12: #{tpu_custom_call.1} parent=5 // pred_fallthru
        _
      %p202 = scmp.lt.s32.totalorder %s15, 2
      // Predicated region
      $region33: #{tpu_custom_call.1} parent=5 // pred_check
        %p203 = pneg %p202
      $region34: #{tpu_custom_call.1} parent=5 // pred_check_branch
        %205 = sbr.rel (%p203) target = $region36
      $region35: #{tpu_custom_call.1} parent=5 // pred_region
        // Predicated region
        $region37: #{tpu_custom_call.1} parent=35 // pred_check
          %p206 = pneg %p35
        $region38: #{tpu_custom_call.1} parent=35 // pred_check_branch
          %208 = sbr.rel (%p206) target = $region40
        $region39: #{tpu_custom_call.1} parent=35 // pred_region
          %p209 = scmp.lt.s32.totalorder %s15, 1
          %s210 = scalar_select %p209, %s15, 1
          %s211 = smul.addr %s210, 8
          %s212 = scalar_lea.vmem %s0, %s211
        $region40: #{tpu_custom_call.1} parent=35 // pred_fallthru
          _
      $region36: #{tpu_custom_call.1} parent=5 // pred_fallthru
        _
      %p213 = scmp.le.s32.totalorder 1, %s15
      %p214 = scmp.lt.s32.totalorder %s15, 3
      %p215 = pnand %p213, %p214
      %p216 = pneg %p215
      // Predicated region
      $region41: #{tpu_custom_call.1} parent=5 // pred_check
        _
      $region42: #{tpu_custom_call.1} parent=5 // pred_check_branch
        %218 = sbr.rel (%p215) target = $region44
      $region43: #{tpu_custom_call.1} parent=5 // pred_region
        %s219 = ssub.s32 %s15, 1
        %p220 = scmp.lt.s32.totalorder %s20, 1
        %s221 = scalar_select %p220, %s20, 1
        %s222 = smul.addr %s221, 8
        %s223 = scalar_lea.vmem %s0, %s222
        %p224 = pneg %p41
        %p225 = pneg %p38
        %p226 = pneg %p62
        %p227 = pneg %p59
        %p228 = pneg %p83
        %p229 = pneg %p80
        %p230 = pneg %p104
        %p231 = pneg %p101
        %p232 = pneg %p125
        %p233 = pneg %p122
        %p234 = pneg %p146
        %p235 = pneg %p143
        %p236 = pneg %p172
        %p237 = pneg %p169
        %s238 = sand.u32 %s159, 1
        %s239 = scalar_lea.sflag [#allocation3], %s238
        %s240 = sand.u32 %s159, 1
        %s241 = smul.addr %s240, 8
        %s242 = scalar_lea.vmem [#allocation2], %s241
        %p243 = scmp.lt.s32.totalorder %s20, 1
        %s244 = scalar_select %p243, %s20, 1
        %s245 = smul.addr %s244, 8
        %s246 = scalar_lea.vmem %s0, %s245
        %v247 = vld [vmem:[%s246] sm:$0xff]
        %v248 = vld [vmem:[%s5] sm:$0xff]
        %vm249 = vcmask 261120
        %v250 = vsel %vm249, %v247, 0.0
        %251 = vadd.xlane.f32.xlu0 %v250
        %v252 = vpop.xlane.xlu0 %251
        %v253 = vrcp.pop 32.0
        %v254 = vmul.f32 32.0, %v253
        %v255 = vsub.f32 1.0, %v254
        %v256 = vmul.f32 %v253, %v255
        %v257 = vadd.f32 %v253, %v256
        %vm258 = vweird.f32 %v253
        %v259 = vsel %vm258, %v253, %v257
        %v260 = vmul.f32 %v252, %v259
        %v261 = vsub.f32 %v247, %v260
        %v262 = vmul.f32 %v261, %v261
        %v263 = vsel %vm249, %v262, 0.0
        %264 = vadd.xlane.f32.xlu0 %v263
        %v265 = vpop.xlane.xlu0 %264
        %v266 = vmul.f32 %v265, %v259
        %v267 = vadd.f32 %v266, 1e-05
        %v268 = vrsqrt.pop %v267
        %v269 = vmul.f32 %v268, %v267
        %v270 = vmul.f32 %v269, %v268
        %v271 = vmul.f32 0.5, %v270
        %v272 = vsub.f32 1.5, %v271
        %v273 = vmul.f32 %v268, %v272
        %vm274 = vweird.f32 %v267
        %vm275 = vweird.f32 %v268
        %vm276 = vmor %vm274, %vm275
        %v277 = vsel %vm276, %v268, %v273
        %v278 = vmul.f32 %v261, %v277
        %v279 = vperm.slane %v248, 1
        %v280 = vmul.f32 %v278, %v279
        %v281 = vperm.slane %v248, 2
        %v282 = vadd.f32 %v280, %v281
        %v283 = vld [vmem:[%s1] sm:$0xff]
        %v284 = vld [vmem:[%s1 + $0x8] sm:$0xff]
        %v285 = vld [vmem:[%s1 + $0x10] sm:$0xff]
        %v286 = vld [vmem:[%s1 + $0x18] sm:$0xff]
        %v287 = vld [vmem:[%s1 + $0x20] sm:$0xff]
        %v288 = vld [vmem:[%s1 + $0x28] sm:$0xff]
        %v289 = vld [vmem:[%s1 + $0x30] sm:$0xff]
        %v290 = vld [vmem:[%s1 + $0x38] sm:$0xff]
        %v291 = vld [vmem:[%s1 + $0x40] sm:$0xff]
        %v292 = vld [vmem:[%s1 + $0x48] sm:$0xff]
        %v293 = vld [vmem:[%s1 + $0x50] sm:$0xff]
        %v294 = vld [vmem:[%s1 + $0x58] sm:$0xff]
        %v295 = vld [vmem:[%s1 + $0x60] sm:$0xff]
        %v296 = vld [vmem:[%s1 + $0x68] sm:$0xff]
        %v297 = vld [vmem:[%s1 + $0x70] sm:$0xff]
        %v298 = vld [vmem:[%s1 + $0x78] sm:$0xff]
        %v299 = vld [vmem:[%s1 + $0x80] sm:$0xff]
        %v300 = vld [vmem:[%s1 + $0x88] sm:$0xff]
        %v301 = vld [vmem:[%s1 + $0x90] sm:$0xff]
        %v302 = vld [vmem:[%s1 + $0x98] sm:$0xff]
        %v303 = vld [vmem:[%s1 + $0xa0] sm:$0xff]
        %v304 = vld [vmem:[%s1 + $0xa8] sm:$0xff]
        %v305 = vld [vmem:[%s1 + $0xb0] sm:$0xff]
        %v306 = vld [vmem:[%s1 + $0xb8] sm:$0xff]
        %v307 = vld [vmem:[%s1 + $0xc0] sm:$0xff]
        %v308 = vld [vmem:[%s1 + $0xc8] sm:$0xff]
        %v309 = vld [vmem:[%s1 + $0xd0] sm:$0xff]
        %v310 = vld [vmem:[%s1 + $0xd8] sm:$0xff]
        %v311 = vld [vmem:[%s1 + $0xe0] sm:$0xff]
        %v312 = vld [vmem:[%s1 + $0xe8] sm:$0xff]
        %v313 = vld [vmem:[%s1 + $0xf0] sm:$0xff]
        %v314 = vld [vmem:[%s1 + $0xf8] sm:$0xff]
        %v315 = vld [vmem:[%s1 + $0x100] sm:$0xff]
        %v316 = vld [vmem:[%s1 + $0x108] sm:$0xff]
        %v317 = vld [vmem:[%s1 + $0x110] sm:$0xff]
        %v318 = vld [vmem:[%s1 + $0x118] sm:$0xff]
        %v319 = vld [vmem:[%s1 + $0x120] sm:$0xff]
        %v320 = vld [vmem:[%s1 + $0x128] sm:$0xff]
        %v321 = vld [vmem:[%s1 + $0x130] sm:$0xff]
        %v322 = vld [vmem:[%s1 + $0x138] sm:$0xff]
        %v323 = vld [vmem:[%s1 + $0x140] sm:$0xff]
        %v324 = vld [vmem:[%s1 + $0x148] sm:$0xff]
        %v325 = vld [vmem:[%s1 + $0x150] sm:$0xff]
        %v326 = vld [vmem:[%s1 + $0x158] sm:$0xff]
        %v327 = vld [vmem:[%s1 + $0x160] sm:$0xff]
        %v328 = vld [vmem:[%s1 + $0x168] sm:$0xff]
        %v329 = vld [vmem:[%s1 + $0x170] sm:$0xff]
        %v330 = vld [vmem:[%s1 + $0x178] sm:$0xff]
        %v332 = vsel %vm249, %v282, 0
        %334 = vmatpush.msra.mxu0 0.0
        %335 = vmatpush.msra.mxu0 0.0
        %336 = vmatpush.msra.mxu0 0.0
        %337 = vmatpush.msra.mxu0 0.0
        %338 = vmatpush.msra.mxu0 0.0
        %339 = vmatpush.msra.mxu0 0.0
        %340 = vmatpush.msra.mxu0 0.0
        %341 = vmatpush.msra.mxu0 0.0
        %342 = vmatpush.msra.mxu0 0.0
        %343 = vmatpush.msra.mxu0 0.0
        %344 = vmatpush.msra.mxu0 0.0
        %345 = vmatpush.msra.mxu0 0.0
        %346 = vmatpush.msra.mxu0 %v286
        %347 = vmatpush.msra.mxu0 %v285
        %348 = vmatpush.msra.mxu0 %v284
        %349 = vmatpush.msra.mxu0 %v283
        %350 = vmatmul.f32.gmra.mxu0 %v332
        %v351 = vpop.f32.mrf.mxu0
        %v352 = vadd.f32 0.0, %v351
        %353 = vdwg.mxu0
        %354 = vmatpush.msra.mxu0 0.0
        %355 = vmatpush.msra.mxu0 0.0
        %356 = vmatpush.msra.mxu0 0.0
        %357 = vmatpush.msra.mxu0 0.0
        %358 = vmatpush.msra.mxu0 0.0
        %359 = vmatpush.msra.mxu0 0.0
        %360 = vmatpush.msra.mxu0 0.0
        %361 = vmatpush.msra.mxu0 0.0
        %362 = vmatpush.msra.mxu0 0.0
        %363 = vmatpush.msra.mxu0 0.0
        %364 = vmatpush.msra.mxu0 0.0
        %365 = vmatpush.msra.mxu0 0.0
        %366 = vmatpush.msra.mxu0 %v290
        %367 = vmatpush.msra.mxu0 %v289
        %368 = vmatpush.msra.mxu0 %v288
        %369 = vmatpush.msra.mxu0 %v287
        %370 = vmatmul.f32.gmra.mxu0 %v332
        %v371 = vpop.f32.mrf.mxu0
        %v372 = vadd.f32 0.0, %v371
        %373 = vdwg.mxu0
        %374 = vmatpush.msra.mxu0 0.0
        %375 = vmatpush.msra.mxu0 0.0
        %376 = vmatpush.msra.mxu0 0.0
        %377 = vmatpush.msra.mxu0 0.0
        %378 = vmatpush.msra.mxu0 0.0
        %379 = vmatpush.msra.mxu0 0.0
        %380 = vmatpush.msra.mxu0 0.0
        %381 = vmatpush.msra.mxu0 0.0
        %382 = vmatpush.msra.mxu0 0.0
        %383 = vmatpush.msra.mxu0 0.0
        %384 = vmatpush.msra.mxu0 0.0
        %385 = vmatpush.msra.mxu0 0.0
        %386 = vmatpush.msra.mxu0 %v294
        %387 = vmatpush.msra.mxu0 %v293
        %388 = vmatpush.msra.mxu0 %v292
        %389 = vmatpush.msra.mxu0 %v291
        %390 = vmatmul.f32.gmra.mxu0 %v332
        %v391 = vpop.f32.mrf.mxu0
        %v392 = vadd.f32 0.0, %v391
        %393 = vdwg.mxu0
        %394 = vmatpush.msra.mxu0 0.0
        %395 = vmatpush.msra.mxu0 0.0
        %396 = vmatpush.msra.mxu0 0.0
        %397 = vmatpush.msra.mxu0 0.0
        %398 = vmatpush.msra.mxu0 0.0
        %399 = vmatpush.msra.mxu0 0.0
        %400 = vmatpush.msra.mxu0 0.0
        %401 = vmatpush.msra.mxu0 0.0
        %402 = vmatpush.msra.mxu0 0.0
        %403 = vmatpush.msra.mxu0 0.0
        %404 = vmatpush.msra.mxu0 0.0
        %405 = vmatpush.msra.mxu0 0.0
        %406 = vmatpush.msra.mxu0 %v298
        %407 = vmatpush.msra.mxu0 %v297
        %408 = vmatpush.msra.mxu0 %v296
        %409 = vmatpush.msra.mxu0 %v295
        %410 = vmatmul.f32.gmra.mxu0 %v332
        %v411 = vpop.f32.mrf.mxu0
        %v412 = vadd.f32 0.0, %v411
        %413 = vdwg.mxu0
        %414 = vmatpush.msra.mxu0 0.0
        %415 = vmatpush.msra.mxu0 0.0
        %416 = vmatpush.msra.mxu0 0.0
        %417 = vmatpush.msra.mxu0 0.0
        %418 = vmatpush.msra.mxu0 0.0
        %419 = vmatpush.msra.mxu0 0.0
        %420 = vmatpush.msra.mxu0 0.0
        %421 = vmatpush.msra.mxu0 0.0
        %422 = vmatpush.msra.mxu0 0.0
        %423 = vmatpush.msra.mxu0 0.0
        %424 = vmatpush.msra.mxu0 0.0
        %425 = vmatpush.msra.mxu0 0.0
        %426 = vmatpush.msra.mxu0 %v302
        %427 = vmatpush.msra.mxu0 %v301
        %428 = vmatpush.msra.mxu0 %v300
        %429 = vmatpush.msra.mxu0 %v299
        %430 = vmatmul.f32.gmra.mxu0 %v332
        %v431 = vpop.f32.mrf.mxu0
        %v432 = vadd.f32 0.0, %v431
        %433 = vdwg.mxu0
        %434 = vmatpush.msra.mxu0 0.0
        %435 = vmatpush.msra.mxu0 0.0
        %436 = vmatpush.msra.mxu0 0.0
        %437 = vmatpush.msra.mxu0 0.0
        %438 = vmatpush.msra.mxu0 0.0
        %439 = vmatpush.msra.mxu0 0.0
        %440 = vmatpush.msra.mxu0 0.0
        %441 = vmatpush.msra.mxu0 0.0
        %442 = vmatpush.msra.mxu0 0.0
        %443 = vmatpush.msra.mxu0 0.0
        %444 = vmatpush.msra.mxu0 0.0
        %445 = vmatpush.msra.mxu0 0.0
        %446 = vmatpush.msra.mxu0 %v306
        %447 = vmatpush.msra.mxu0 %v305
        %448 = vmatpush.msra.mxu0 %v304
        %449 = vmatpush.msra.mxu0 %v303
        %450 = vmatmul.f32.gmra.mxu0 %v332
        %v451 = vpop.f32.mrf.mxu0
        %v452 = vadd.f32 0.0, %v451
        %453 = vdwg.mxu0
        %454 = vmatpush.msra.mxu0 0.0
        %455 = vmatpush.msra.mxu0 0.0
        %456 = vmatpush.msra.mxu0 0.0
        %457 = vmatpush.msra.mxu0 0.0
        %458 = vmatpush.msra.mxu0 0.0
        %459 = vmatpush.msra.mxu0 0.0
        %460 = vmatpush.msra.mxu0 0.0
        %461 = vmatpush.msra.mxu0 0.0
        %462 = vmatpush.msra.mxu0 0.0
        %463 = vmatpush.msra.mxu0 0.0
        %464 = vmatpush.msra.mxu0 0.0
        %465 = vmatpush.msra.mxu0 0.0
        %466 = vmatpush.msra.mxu0 %v310
        %467 = vmatpush.msra.mxu0 %v309
        %468 = vmatpush.msra.mxu0 %v308
        %469 = vmatpush.msra.mxu0 %v307
        %470 = vmatmul.f32.gmra.mxu0 %v332
        %v471 = vpop.f32.mrf.mxu0
        %v472 = vadd.f32 0.0, %v471
        %473 = vdwg.mxu0
        %474 = vmatpush.msra.mxu0 0.0
        %475 = vmatpush.msra.mxu0 0.0
        %476 = vmatpush.msra.mxu0 0.0
        %477 = vmatpush.msra.mxu0 0.0
        %478 = vmatpush.msra.mxu0 0.0
        %479 = vmatpush.msra.mxu0 0.0
        %480 = vmatpush.msra.mxu0 0.0
        %481 = vmatpush.msra.mxu0 0.0
        %482 = vmatpush.msra.mxu0 0.0
        %483 = vmatpush.msra.mxu0 0.0
        %484 = vmatpush.msra.mxu0 0.0
        %485 = vmatpush.msra.mxu0 0.0
        %486 = vmatpush.msra.mxu0 %v314
        %487 = vmatpush.msra.mxu0 %v313
        %488 = vmatpush.msra.mxu0 %v312
        %489 = vmatpush.msra.mxu0 %v311
        %490 = vmatmul.f32.gmra.mxu0 %v332
        %v491 = vpop.f32.mrf.mxu0
        %v492 = vadd.f32 0.0, %v491
        %493 = vdwg.mxu0
        %494 = vmatpush.msra.mxu0 0.0
        %495 = vmatpush.msra.mxu0 0.0
        %496 = vmatpush.msra.mxu0 0.0
        %497 = vmatpush.msra.mxu0 0.0
        %498 = vmatpush.msra.mxu0 0.0
        %499 = vmatpush.msra.mxu0 0.0
        %500 = vmatpush.msra.mxu0 0.0
        %501 = vmatpush.msra.mxu0 0.0
        %502 = vmatpush.msra.mxu0 0.0
        %503 = vmatpush.msra.mxu0 0.0
        %504 = vmatpush.msra.mxu0 0.0
        %505 = vmatpush.msra.mxu0 0.0
        %506 = vmatpush.msra.mxu0 %v318
        %507 = vmatpush.msra.mxu0 %v317
        %508 = vmatpush.msra.mxu0 %v316
        %509 = vmatpush.msra.mxu0 %v315
        %510 = vmatmul.f32.gmra.mxu0 %v332
        %v511 = vpop.f32.mrf.mxu0
        %v512 = vadd.f32 0.0, %v511
        %513 = vdwg.mxu0
        %514 = vmatpush.msra.mxu0 0.0
        %515 = vmatpush.msra.mxu0 0.0
        %516 = vmatpush.msra.mxu0 0.0
        %517 = vmatpush.msra.mxu0 0.0
        %518 = vmatpush.msra.mxu0 0.0
        %519 = vmatpush.msra.mxu0 0.0
        %520 = vmatpush.msra.mxu0 0.0
        %521 = vmatpush.msra.mxu0 0.0
        %522 = vmatpush.msra.mxu0 0.0
        %523 = vmatpush.msra.mxu0 0.0
        %524 = vmatpush.msra.mxu0 0.0
        %525 = vmatpush.msra.mxu0 0.0
        %526 = vmatpush.msra.mxu0 %v322
        %527 = vmatpush.msra.mxu0 %v321
        %528 = vmatpush.msra.mxu0 %v320
        %529 = vmatpush.msra.mxu0 %v319
        %530 = vmatmul.f32.gmra.mxu0 %v332
        %v531 = vpop.f32.mrf.mxu0
        %v532 = vadd.f32 0.0, %v531
        %533 = vdwg.mxu0
        %534 = vmatpush.msra.mxu0 0.0
        %535 = vmatpush.msra.mxu0 0.0
        %536 = vmatpush.msra.mxu0 0.0
        %537 = vmatpush.msra.mxu0 0.0
        %538 = vmatpush.msra.mxu0 0.0
        %539 = vmatpush.msra.mxu0 0.0
        %540 = vmatpush.msra.mxu0 0.0
        %541 = vmatpush.msra.mxu0 0.0
        %542 = vmatpush.msra.mxu0 0.0
        %543 = vmatpush.msra.mxu0 0.0
        %544 = vmatpush.msra.mxu0 0.0
        %545 = vmatpush.msra.mxu0 0.0
        %546 = vmatpush.msra.mxu0 %v326
        %547 = vmatpush.msra.mxu0 %v325
        %548 = vmatpush.msra.mxu0 %v324
        %549 = vmatpush.msra.mxu0 %v323
        %550 = vmatmul.f32.gmra.mxu0 %v332
        %v551 = vpop.f32.mrf.mxu0
        %v552 = vadd.f32 0.0, %v551
        %553 = vdwg.mxu0
        %554 = vmatpush.msra.mxu0 0.0
        %555 = vmatpush.msra.mxu0 0.0
        %556 = vmatpush.msra.mxu0 0.0
        %557 = vmatpush.msra.mxu0 0.0
        %558 = vmatpush.msra.mxu0 0.0
        %559 = vmatpush.msra.mxu0 0.0
        %560 = vmatpush.msra.mxu0 0.0
        %561 = vmatpush.msra.mxu0 0.0
        %562 = vmatpush.msra.mxu0 0.0
        %563 = vmatpush.msra.mxu0 0.0
        %564 = vmatpush.msra.mxu0 0.0
        %565 = vmatpush.msra.mxu0 0.0
        %566 = vmatpush.msra.mxu0 %v330
        %567 = vmatpush.msra.mxu0 %v329
        %568 = vmatpush.msra.mxu0 %v328
        %569 = vmatpush.msra.mxu0 %v327
        %570 = vmatmul.f32.gmra.mxu0 %v332
        %v571 = vpop.f32.mrf.mxu0
        %v572 = vadd.f32 0.0, %v571
        %573 = vdwg.mxu0
        %v574 = vlaneseq
        %v575 = vshrl.u32 %v574, 7
        %v576 = vlaneseq
        %v577 = vand.u32 %v576, 127
        %vm578 = vcmp.ge.s32.totalorder %v575, %v577
        %v579 = vsel %vm578, 0.0, -1e+30
        %vm580 = vcmask 64512
        %v582 = vsel %vm580, %v352, 0
        %v585 = vsel %vm580, %v432, 0
        %587 = vmatpush.xpose.msra.mxu0 0.0
        %588 = vmatpush.xpose.msra.mxu0 0.0
        %589 = vmatpush.xpose.msra.mxu0 0.0
        %590 = vmatpush.xpose.msra.mxu0 0.0
        %591 = vmatpush.xpose.msra.mxu0 0.0
        %592 = vmatpush.xpose.msra.mxu0 0.0
        %593 = vmatpush.xpose.msra.mxu0 0.0
        %594 = vmatpush.xpose.msra.mxu0 0.0
        %595 = vmatpush.xpose.msra.mxu0 0.0
        %596 = vmatpush.xpose.msra.mxu0 0.0
        %597 = vmatpush.xpose.msra.mxu0 0.0
        %598 = vmatpush.xpose.msra.mxu0 0.0
        %599 = vmatpush.xpose.msra.mxu0 0.0
        %600 = vmatpush.xpose.msra.mxu0 0.0
        %601 = vmatpush.xpose.msra.mxu0 0.0
        %602 = vmatpush.xpose.msra.mxu0 %v585
        %603 = vmatmul.f32.gmra.mxu0 %v582
        %v604 = vpop.f32.mrf.mxu0
        %v605 = vadd.f32 %v579, %v604
        %606 = vdwg.mxu0
        %v608 = vsel %vm580, %v372, 0
        %v611 = vsel %vm580, %v452, 0
        %613 = vmatpush.xpose.msra.mxu0 0.0
        %614 = vmatpush.xpose.msra.mxu0 0.0
        %615 = vmatpush.xpose.msra.mxu0 0.0
        %616 = vmatpush.xpose.msra.mxu0 0.0
        %617 = vmatpush.xpose.msra.mxu0 0.0
        %618 = vmatpush.xpose.msra.mxu0 0.0
        %619 = vmatpush.xpose.msra.mxu0 0.0
        %620 = vmatpush.xpose.msra.mxu0 0.0
        %621 = vmatpush.xpose.msra.mxu0 0.0
        %622 = vmatpush.xpose.msra.mxu0 0.0
        %623 = vmatpush.xpose.msra.mxu0 0.0
        %624 = vmatpush.xpose.msra.mxu0 0.0
        %625 = vmatpush.xpose.msra.mxu0 0.0
        %626 = vmatpush.xpose.msra.mxu0 0.0
        %627 = vmatpush.xpose.msra.mxu0 0.0
        %628 = vmatpush.xpose.msra.mxu0 %v611
        %629 = vmatmul.f32.gmra.mxu0 %v608
        %v630 = vpop.f32.mrf.mxu0
        %v631 = vadd.f32 %v579, %v630
        %632 = vdwg.mxu0
        %v634 = vsel %vm580, %v392, 0
        %v637 = vsel %vm580, %v472, 0
        %639 = vmatpush.xpose.msra.mxu0 0.0
        %640 = vmatpush.xpose.msra.mxu0 0.0
        %641 = vmatpush.xpose.msra.mxu0 0.0
        %642 = vmatpush.xpose.msra.mxu0 0.0
        %643 = vmatpush.xpose.msra.mxu0 0.0
        %644 = vmatpush.xpose.msra.mxu0 0.0
        %645 = vmatpush.xpose.msra.mxu0 0.0
        %646 = vmatpush.xpose.msra.mxu0 0.0
        %647 = vmatpush.xpose.msra.mxu0 0.0
        %648 = vmatpush.xpose.msra.mxu0 0.0
        %649 = vmatpush.xpose.msra.mxu0 0.0
        %650 = vmatpush.xpose.msra.mxu0 0.0
        %651 = vmatpush.xpose.msra.mxu0 0.0
        %652 = vmatpush.xpose.msra.mxu0 0.0
        %653 = vmatpush.xpose.msra.mxu0 0.0
        %654 = vmatpush.xpose.msra.mxu0 %v637
        %655 = vmatmul.f32.gmra.mxu0 %v634
        %v656 = vpop.f32.mrf.mxu0
        %v657 = vadd.f32 %v579, %v656
        %658 = vdwg.mxu0
        %v660 = vsel %vm580, %v412, 0
        %v663 = vsel %vm580, %v492, 0
        %665 = vmatpush.xpose.msra.mxu0 0.0
        %666 = vmatpush.xpose.msra.mxu0 0.0
        %667 = vmatpush.xpose.msra.mxu0 0.0
        %668 = vmatpush.xpose.msra.mxu0 0.0
        %669 = vmatpush.xpose.msra.mxu0 0.0
        %670 = vmatpush.xpose.msra.mxu0 0.0
        %671 = vmatpush.xpose.msra.mxu0 0.0
        %672 = vmatpush.xpose.msra.mxu0 0.0
        %673 = vmatpush.xpose.msra.mxu0 0.0
        %674 = vmatpush.xpose.msra.mxu0 0.0
        %675 = vmatpush.xpose.msra.mxu0 0.0
        %676 = vmatpush.xpose.msra.mxu0 0.0
        %677 = vmatpush.xpose.msra.mxu0 0.0
        %678 = vmatpush.xpose.msra.mxu0 0.0
        %679 = vmatpush.xpose.msra.mxu0 0.0
        %680 = vmatpush.xpose.msra.mxu0 %v663
        %681 = vmatmul.f32.gmra.mxu0 %v660
        %v682 = vpop.f32.mrf.mxu0
        %v683 = vadd.f32 %v579, %v682
        %684 = vdwg.mxu0
        %v685 = vsel %vm580, %v605, -inf
        %686 = vmax.xlane.f32.xlu0 %v685
        %v687 = vpop.xlane.xlu0 %686
        %v688 = vsel %vm580, %v631, -inf
        %689 = vmax.xlane.f32.xlu0 %v688
        %v690 = vpop.xlane.xlu0 %689
        %v691 = vsel %vm580, %v657, -inf
        %692 = vmax.xlane.f32.xlu0 %v691
        %v693 = vpop.xlane.xlu0 %692
        %v694 = vsel %vm580, %v683, -inf
        %695 = vmax.xlane.f32.xlu0 %v694
        %v696 = vpop.xlane.xlu0 %695
        %v697 = vsub.f32 %v605, %v687
        %v698 = vsub.f32 %v631, %v690
        %v699 = vsub.f32 %v657, %v693
        %v700 = vsub.f32 %v683, %v696
        %v701 = vmul.f32 %v697, 1.442695
        %v702 = vpow.pop %v701
        %v703 = vmul.f32 %v698, 1.442695
        %v704 = vpow.pop %v703
        %v705 = vmul.f32 %v699, 1.442695
        %v706 = vpow.pop %v705
        %v707 = vmul.f32 %v700, 1.442695
        %v708 = vpow.pop %v707
        %v709 = vsel %vm580, %v702, 0.0
        %710 = vadd.xlane.f32.xlu0 %v709
        %v711 = vpop.xlane.xlu0 %710
        %v712 = vsel %vm580, %v704, 0.0
        %713 = vadd.xlane.f32.xlu0 %v712
        %v714 = vpop.xlane.xlu0 %713
        %v715 = vsel %vm580, %v706, 0.0
        %716 = vadd.xlane.f32.xlu0 %v715
        %v717 = vpop.xlane.xlu0 %716
        %v718 = vsel %vm580, %v708, 0.0
        %719 = vadd.xlane.f32.xlu0 %v718
        %v720 = vpop.xlane.xlu0 %719
        %v721 = vrcp.pop %v711
        %v722 = vmul.f32 %v711, %v721
        %v723 = vsub.f32 1.0, %v722
        %v724 = vmul.f32 %v721, %v723
        %v725 = vadd.f32 %v721, %v724
        %vm726 = vweird.f32 %v711
        %vm727 = vweird.f32 %v721
        %vm728 = vmor %vm726, %vm727
        %v729 = vsel %vm728, %v721, %v725
        %v730 = vand.u32 2147483647, %v711
        %vm731 = vcmp.eq.f32.partialorder %v730, 8.507059e+37
        %v732 = vand.u32 %v711, 2147483648
        %v733 = vor.u32 1.1754944e-38, %v732
        %v734 = vsel %vm731, %v733, %v729
        %v735 = vmul.f32 %v702, %v734
        %v736 = vrcp.pop %v714
        %v737 = vmul.f32 %v714, %v736
        %v738 = vsub.f32 1.0, %v737
        %v739 = vmul.f32 %v736, %v738
        %v740 = vadd.f32 %v736, %v739
        %vm741 = vweird.f32 %v714
        %vm742 = vweird.f32 %v736
        %vm743 = vmor %vm741, %vm742
        %v744 = vsel %vm743, %v736, %v740
        %v745 = vand.u32 2147483647, %v714
        %vm746 = vcmp.eq.f32.partialorder %v745, 8.507059e+37
        %v747 = vand.u32 %v714, 2147483648
        %v748 = vor.u32 1.1754944e-38, %v747
        %v749 = vsel %vm746, %v748, %v744
        %v750 = vmul.f32 %v704, %v749
        %v751 = vrcp.pop %v717
        %v752 = vmul.f32 %v717, %v751
        %v753 = vsub.f32 1.0, %v752
        %v754 = vmul.f32 %v751, %v753
        %v755 = vadd.f32 %v751, %v754
        %vm756 = vweird.f32 %v717
        %vm757 = vweird.f32 %v751
        %vm758 = vmor %vm756, %vm757
        %v759 = vsel %vm758, %v751, %v755
        %v760 = vand.u32 2147483647, %v717
        %vm761 = vcmp.eq.f32.partialorder %v760, 8.507059e+37
        %v762 = vand.u32 %v717, 2147483648
        %v763 = vor.u32 1.1754944e-38, %v762
        %v764 = vsel %vm761, %v763, %v759
        %v765 = vmul.f32 %v706, %v764
        %v766 = vrcp.pop %v720
        %v767 = vmul.f32 %v720, %v766
        %v768 = vsub.f32 1.0, %v767
        %v769 = vmul.f32 %v766, %v768
        %v770 = vadd.f32 %v766, %v769
        %vm771 = vweird.f32 %v720
        %vm772 = vweird.f32 %v766
        %vm773 = vmor %vm771, %vm772
        %v774 = vsel %vm773, %v766, %v770
        %v775 = vand.u32 2147483647, %v720
        %vm776 = vcmp.eq.f32.partialorder %v775, 8.507059e+37
        %v777 = vand.u32 %v720, 2147483648
        %v778 = vor.u32 1.1754944e-38, %v777
        %v779 = vsel %vm776, %v778, %v774
        %v780 = vmul.f32 %v708, %v779
        %v782 = vsel %vm580, %v735, 0
        %784 = vmatpush.msra.mxu0 0.0
        %785 = vmatpush.msra.mxu0 0.0
        %786 = vmatpush.msra.mxu0 0.0
        %787 = vmatpush.msra.mxu0 0.0
        %788 = vmatpush.msra.mxu0 0.0
        %789 = vmatpush.msra.mxu0 0.0
        %790 = vmatpush.msra.mxu0 0.0
        %791 = vmatpush.msra.mxu0 0.0
        %792 = vmatpush.msra.mxu0 0.0
        %793 = vmatpush.msra.mxu0 0.0
        %794 = vmatpush.msra.mxu0 0.0
        %795 = vmatpush.msra.mxu0 0.0
        %796 = vmatpush.msra.mxu0 0.0
        %797 = vmatpush.msra.mxu0 0.0
        %798 = vmatpush.msra.mxu0 0.0
        %799 = vmatpush.msra.mxu0 %v512
        %800 = vmatmul.f32.gmra.mxu0 %v782
        %v801 = vpop.f32.mrf.mxu0
        %v802 = vadd.f32 0.0, %v801
        %803 = vdwg.mxu0
        %v805 = vsel %vm580, %v750, 0
        %807 = vmatpush.msra.mxu0 0.0
        %808 = vmatpush.msra.mxu0 0.0
        %809 = vmatpush.msra.mxu0 0.0
        %810 = vmatpush.msra.mxu0 0.0
        %811 = vmatpush.msra.mxu0 0.0
        %812 = vmatpush.msra.mxu0 0.0
        %813 = vmatpush.msra.mxu0 0.0
        %814 = vmatpush.msra.mxu0 0.0
        %815 = vmatpush.msra.mxu0 0.0
        %816 = vmatpush.msra.mxu0 0.0
        %817 = vmatpush.msra.mxu0 0.0
        %818 = vmatpush.msra.mxu0 0.0
        %819 = vmatpush.msra.mxu0 0.0
        %820 = vmatpush.msra.mxu0 0.0
        %821 = vmatpush.msra.mxu0 0.0
        %822 = vmatpush.msra.mxu0 %v532
        %823 = vmatmul.f32.gmra.mxu0 %v805
        %v824 = vpop.f32.mrf.mxu0
        %v825 = vadd.f32 0.0, %v824
        %826 = vdwg.mxu0
        %v828 = vsel %vm580, %v765, 0
        %830 = vmatpush.msra.mxu0 0.0
        %831 = vmatpush.msra.mxu0 0.0
        %832 = vmatpush.msra.mxu0 0.0
        %833 = vmatpush.msra.mxu0 0.0
        %834 = vmatpush.msra.mxu0 0.0
        %835 = vmatpush.msra.mxu0 0.0
        %836 = vmatpush.msra.mxu0 0.0
        %837 = vmatpush.msra.mxu0 0.0
        %838 = vmatpush.msra.mxu0 0.0
        %839 = vmatpush.msra.mxu0 0.0
        %840 = vmatpush.msra.mxu0 0.0
        %841 = vmatpush.msra.mxu0 0.0
        %842 = vmatpush.msra.mxu0 0.0
        %843 = vmatpush.msra.mxu0 0.0
        %844 = vmatpush.msra.mxu0 0.0
        %845 = vmatpush.msra.mxu0 %v552
        %846 = vmatmul.f32.gmra.mxu0 %v828
        %v847 = vpop.f32.mrf.mxu0
        %v848 = vadd.f32 0.0, %v847
        %849 = vdwg.mxu0
        %v851 = vsel %vm580, %v780, 0
        %853 = vmatpush.msra.mxu0 0.0
        %854 = vmatpush.msra.mxu0 0.0
        %855 = vmatpush.msra.mxu0 0.0
        %856 = vmatpush.msra.mxu0 0.0
        %857 = vmatpush.msra.mxu0 0.0
        %858 = vmatpush.msra.mxu0 0.0
        %859 = vmatpush.msra.mxu0 0.0
        %860 = vmatpush.msra.mxu0 0.0
        %861 = vmatpush.msra.mxu0 0.0
        %862 = vmatpush.msra.mxu0 0.0
        %863 = vmatpush.msra.mxu0 0.0
        %864 = vmatpush.msra.mxu0 0.0
        %865 = vmatpush.msra.mxu0 0.0
        %866 = vmatpush.msra.mxu0 0.0
        %867 = vmatpush.msra.mxu0 0.0
        %868 = vmatpush.msra.mxu0 %v572
        %869 = vmatmul.f32.gmra.mxu0 %v851
        %v870 = vpop.f32.mrf.mxu0
        %v871 = vadd.f32 0.0, %v870
        %872 = vdwg.mxu0
        %v873 = vld [vmem:[%s2] sm:$0xff]
        %v874 = vld [vmem:[%s2 + $0x8] sm:$0xff]
        %v875 = vld [vmem:[%s2 + $0x10] sm:$0xff]
        %v876 = vld [vmem:[%s2 + $0x18] sm:$0xff]
        %v878 = vsel %vm580, %v802, 0
        %880 = vmatpush.msra.mxu0 0.0
        %881 = vmatpush.msra.mxu0 0.0
        %882 = vmatpush.msra.mxu0 0.0
        %883 = vmatpush.msra.mxu0 0.0
        %884 = vmatpush.msra.mxu0 0.0
        %885 = vmatpush.msra.mxu0 0.0
        %886 = vmatpush.msra.mxu0 0.0
        %887 = vmatpush.msra.mxu0 0.0
        %888 = vmatpush.msra.mxu0 0.0
        %889 = vmatpush.msra.mxu0 0.0
        %890 = vmatpush.msra.mxu0 0.0
        %891 = vmatpush.msra.mxu0 0.0
        %892 = vmatpush.msra.mxu0 0.0
        %893 = vmatpush.msra.mxu0 0.0
        %894 = vmatpush.msra.mxu0 0.0
        %895 = vmatpush.msra.mxu0 %v873
        %896 = vmatmul.f32.gmra.mxu0 %v878
        %v897 = vpop.f32.mrf.mxu0
        %v898 = vadd.f32 0.0, %v897
        %899 = vdwg.mxu0
        %v901 = vsel %vm580, %v825, 0
        %903 = vmatpush.msra.mxu0 0.0
        %904 = vmatpush.msra.mxu0 0.0
        %905 = vmatpush.msra.mxu0 0.0
        %906 = vmatpush.msra.mxu0 0.0
        %907 = vmatpush.msra.mxu0 0.0
        %908 = vmatpush.msra.mxu0 0.0
        %909 = vmatpush.msra.mxu0 0.0
        %910 = vmatpush.msra.mxu0 0.0
        %911 = vmatpush.msra.mxu0 0.0
        %912 = vmatpush.msra.mxu0 0.0
        %913 = vmatpush.msra.mxu0 0.0
        %914 = vmatpush.msra.mxu0 0.0
        %915 = vmatpush.msra.mxu0 0.0
        %916 = vmatpush.msra.mxu0 0.0
        %917 = vmatpush.msra.mxu0 0.0
        %918 = vmatpush.msra.mxu0 %v874
        %919 = vmatmul.f32.gmra.mxu0 %v901
        %v920 = vpop.f32.mrf.mxu0
        %v921 = vadd.f32 0.0, %v920
        %922 = vdwg.mxu0
        %v924 = vsel %vm580, %v848, 0
        %926 = vmatpush.msra.mxu0 0.0
        %927 = vmatpush.msra.mxu0 0.0
        %928 = vmatpush.msra.mxu0 0.0
        %929 = vmatpush.msra.mxu0 0.0
        %930 = vmatpush.msra.mxu0 0.0
        %931 = vmatpush.msra.mxu0 0.0
        %932 = vmatpush.msra.mxu0 0.0
        %933 = vmatpush.msra.mxu0 0.0
        %934 = vmatpush.msra.mxu0 0.0
        %935 = vmatpush.msra.mxu0 0.0
        %936 = vmatpush.msra.mxu0 0.0
        %937 = vmatpush.msra.mxu0 0.0
        %938 = vmatpush.msra.mxu0 0.0
        %939 = vmatpush.msra.mxu0 0.0
        %940 = vmatpush.msra.mxu0 0.0
        %941 = vmatpush.msra.mxu0 %v875
        %942 = vmatmul.f32.gmra.mxu0 %v924
        %v943 = vpop.f32.mrf.mxu0
        %v944 = vadd.f32 0.0, %v943
        %945 = vdwg.mxu0
        %v947 = vsel %vm580, %v871, 0
        %949 = vmatpush.msra.mxu0 0.0
        %950 = vmatpush.msra.mxu0 0.0
        %951 = vmatpush.msra.mxu0 0.0
        %952 = vmatpush.msra.mxu0 0.0
        %953 = vmatpush.msra.mxu0 0.0
        %954 = vmatpush.msra.mxu0 0.0
        %955 = vmatpush.msra.mxu0 0.0
        %956 = vmatpush.msra.mxu0 0.0
        %957 = vmatpush.msra.mxu0 0.0
        %958 = vmatpush.msra.mxu0 0.0
        %959 = vmatpush.msra.mxu0 0.0
        %960 = vmatpush.msra.mxu0 0.0
        %961 = vmatpush.msra.mxu0 0.0
        %962 = vmatpush.msra.mxu0 0.0
        %963 = vmatpush.msra.mxu0 0.0
        %964 = vmatpush.msra.mxu0 %v876
        %965 = vmatmul.f32.gmra.mxu0 %v947
        %v966 = vpop.f32.mrf.mxu0
        %v967 = vadd.f32 0.0, %v966
        %968 = vdwg.mxu0
        %v969 = vadd.f32 %v898, %v921
        %v970 = vadd.f32 %v969, %v944
        %v971 = vadd.f32 %v970, %v967
        %v972 = vperm.slane %v248, 5
        %v973 = vadd.f32 %v971, %v972
        %v974 = vadd.f32 %v247, %v973
        %v975 = vsel %vm249, %v974, 0.0
        %976 = vadd.xlane.f32.xlu0 %v975
        %v977 = vpop.xlane.xlu0 %976
        %v978 = vmul.f32 %v977, %v259
        %v979 = vsub.f32 %v974, %v978
        %v980 = vmul.f32 %v979, %v979
        %v981 = vsel %vm249, %v980, 0.0
        %982 = vadd.xlane.f32.xlu0 %v981
        %v983 = vpop.xlane.xlu0 %982
        %v984 = vmul.f32 %v983, %v259
        %v985 = vadd.f32 %v984, 1e-05
        %v986 = vrsqrt.pop %v985
        %v987 = vmul.f32 %v986, %v985
        %v988 = vmul.f32 %v987, %v986
        %v989 = vmul.f32 0.5, %v988
        %v990 = vsub.f32 1.5, %v989
        %v991 = vmul.f32 %v986, %v990
        %vm992 = vweird.f32 %v985
        %vm993 = vweird.f32 %v986
        %vm994 = vmor %vm992, %vm993
        %v995 = vsel %vm994, %v986, %v991
        %v996 = vmul.f32 %v979, %v995
        %v997 = vperm.slane %v248, 3
        %v998 = vmul.f32 %v996, %v997
        %v999 = vperm.slane %v248, 4
        %v1000 = vadd.f32 %v998, %v999
        %v1001 = vld [vmem:[%s3] sm:$0xff]
        %v1002 = vld [vmem:[%s3 + $0x8] sm:$0xff]
        %v1003 = vld [vmem:[%s3 + $0x10] sm:$0xff]
        %v1004 = vld [vmem:[%s3 + $0x18] sm:$0xff]
        %v1005 = vperm.slane %v248, 0
        %v1007 = vsel %vm249, %v1000, 0
        %1009 = vmatpush.msra.mxu0 0.0
        %1010 = vmatpush.msra.mxu0 0.0
        %1011 = vmatpush.msra.mxu0 0.0
        %1012 = vmatpush.msra.mxu0 0.0
        %1013 = vmatpush.msra.mxu0 0.0
        %1014 = vmatpush.msra.mxu0 0.0
        %1015 = vmatpush.msra.mxu0 0.0
        %1016 = vmatpush.msra.mxu0 0.0
        %1017 = vmatpush.msra.mxu0 0.0
        %1018 = vmatpush.msra.mxu0 0.0
        %1019 = vmatpush.msra.mxu0 0.0
        %1020 = vmatpush.msra.mxu0 0.0
        %1021 = vmatpush.msra.mxu0 %v1004
        %1022 = vmatpush.msra.mxu0 %v1003
        %1023 = vmatpush.msra.mxu0 %v1002
        %1024 = vmatpush.msra.mxu0 %v1001
        %1025 = vmatmul.f32.gmra.mxu0 %v1007
        %v1026 = vpop.f32.mrf.mxu0
        %v1027 = vadd.f32 %v1005, %v1026
        %1028 = vdwg.mxu0
        %v1029 = vmax.f32 %v1027, 0.0
        %v1030 = vld [vmem:[%s4] sm:$0xff]
        %v1031 = vld [vmem:[%s4 + $0x8] sm:$0xff]
        %v1032 = vld [vmem:[%s4 + $0x10] sm:$0xff]
        %v1033 = vld [vmem:[%s4 + $0x18] sm:$0xff]
        %v1034 = vld [vmem:[%s4 + $0x20] sm:$0xff]
        %v1035 = vld [vmem:[%s4 + $0x28] sm:$0xff]
        %v1036 = vld [vmem:[%s4 + $0x30] sm:$0xff]
        %v1037 = vld [vmem:[%s4 + $0x38] sm:$0xff]
        %v1038 = vld [vmem:[%s4 + $0x40] sm:$0xff]
        %v1039 = vld [vmem:[%s4 + $0x48] sm:$0xff]
        %v1040 = vld [vmem:[%s4 + $0x50] sm:$0xff]
        %v1041 = vld [vmem:[%s4 + $0x58] sm:$0xff]
        %v1042 = vld [vmem:[%s4 + $0x60] sm:$0xff]
        %v1043 = vld [vmem:[%s4 + $0x68] sm:$0xff]
        %v1044 = vld [vmem:[%s4 + $0x70] sm:$0xff]
        %v1045 = vld [vmem:[%s4 + $0x78] sm:$0xff]
        %v1046 = vperm.slane %v248, 6
        %1047 = vmatpush.msra.mxu0 %v1045
        %1048 = vmatpush.msra.mxu0 %v1044
        %1049 = vmatpush.msra.mxu0 %v1043
        %1050 = vmatpush.msra.mxu0 %v1042
        %1051 = vmatpush.msra.mxu0 %v1041
        %1052 = vmatpush.msra.mxu0 %v1040
        %1053 = vmatpush.msra.mxu0 %v1039
        %1054 = vmatpush.msra.mxu0 %v1038
        %1055 = vmatpush.msra.mxu0 %v1037
        %1056 = vmatpush.msra.mxu0 %v1036
        %1057 = vmatpush.msra.mxu0 %v1035
        %1058 = vmatpush.msra.mxu0 %v1034
        %1059 = vmatpush.msra.mxu0 %v1033
        %1060 = vmatpush.msra.mxu0 %v1032
        %1061 = vmatpush.msra.mxu0 %v1031
        %1062 = vmatpush.msra.mxu0 %v1030
        %1063 = vmatmul.f32.gmra.mxu0 %v1029
        %v1064 = vpop.f32.mrf.mxu0
        %v1065 = vadd.f32 %v1046, %v1064
        %1066 = vdwg.mxu0
        %v1067 = vadd.f32 %v974, %v1065
        %1068 = vst.msk [vmem:[%s242] sm:$0xff] %vm249, %v1067
        %s1069 = sand.u32 %s159, 1
        %s1070 = scalar_lea.sflag [#allocation3], %s1069
        %s1071 = sand.u32 %s159, 1
        %s1072 = smul.addr %s1071, 8
        %s1073 = scalar_lea.vmem [#allocation2], %s1072
        // Predicated region
        $region45: #{tpu_custom_call.1} parent=43 // pred_check
          %p1074 = pneg %p169
        $region46: #{tpu_custom_call.1} parent=43 // pred_check_branch
          %1076 = sbr.rel (%p1074) target = $region48
        $region47: #{tpu_custom_call.1} parent=43 // pred_region
          %1078 = vsyncadd %s1070, 0
          %s1079 = smul.addr %s20, 8
          %s1080 = scalar_lea.hbm %s6, %s1079
          %s1082 = sshll.u32 %s1073, 4
          %s1083 = int_to_ptr.vmem [resolvable:$true] %s1082
          %s1084 = sshll.u32 %s1080, 4
          %s1085 = int_to_ptr.hbm [resolvable:$true] %s1084
          %1087 = dma.vmem_to_hbm [thread:$0]  %s1083, 128, %s1085, %s1070
        $region48: #{tpu_custom_call.1} parent=43 // pred_fallthru
          _
      $region44: #{tpu_custom_call.1} parent=5 // pred_fallthru
        _
      %p1088 = scmp.le.s32.totalorder 2, %s15
      // Predicated region
      $region49: #{tpu_custom_call.1} parent=5 // pred_check
        %p1089 = pneg %p1088
      $region50: #{tpu_custom_call.1} parent=5 // pred_check_branch
        %1091 = sbr.rel (%p1089) target = $region52
      $region51: #{tpu_custom_call.1} parent=5 // pred_region
        %s1092 = ssub.s32 %s15, 2
        // Predicated region
        $region53: #{tpu_custom_call.1} parent=51 // pred_check
          %p1093 = pneg %p175
        $region54: #{tpu_custom_call.1} parent=51 // pred_check_branch
          %1095 = sbr.rel (%p1093) target = $region56
        $region55: #{tpu_custom_call.1} parent=51 // pred_region
          %s1096 = sand.u32 %s160, 1
          %s1097 = scalar_lea.sflag [#allocation3], %s1096
          %s1098 = sand.u32 %s160, 1
          %s1099 = smul.addr %s1098, 8
          %s1100 = scalar_lea.vmem [#allocation2], %s1099
          %1102 = dma.done %s1097, 128
        $region56: #{tpu_custom_call.1} parent=51 // pred_fallthru
          _
      $region52: #{tpu_custom_call.1} parent=5 // pred_fallthru
        _
    $region6: #{tpu_custom_call.1} parent=1 // loop_footer
      %s19 = sadd.s32 1, %s15
    $region7: #{tpu_custom_call.1} parent=1 // loop_footer_branch
      %14 = sbr.rel target = $region3
    $region8: #{tpu_custom_call.1} parent=1 // loop_exit
      _
    %1103 = vsyncpa [#allocation3], 1
    %s1104 = scalar_lea.sflag [#allocation3], 1
    %1105 = vsyncpa %s1104, 1

</llo_original>
